<compile_context>
chip_gen: v7x
topology: tpu7x:2x2x1
jax: 0.10.0
libtpu: 0.0.40
codegen_flags: <defaults>
</compile_context>

<pallas_src>
import functools

import jax
import jax.numpy as jnp
from jax import lax
from jax.experimental import pallas as pl
from jax.experimental.pallas import tpu as pltpu

MAXPAD = 3                      # largest kernel is 7 -> 3-row halo each side
KSIZES = (1, 3, 5, 7)
NTAPS = sum(KSIZES)             # 16 depthwise taps total
WB_ROWS = NTAPS + len(KSIZES)   # 16 tap rows + 4 bias rows = 20


def _gelu(x, approximate):
    """GELU. approximate=False matches PyTorch nn.GELU (exact erf) via an
    exp-based erf approximation (|err| < 1.5e-7) that lowers on all targets;
    approximate=True uses the tanh form (rides the EUP instead of the VALU)."""
    if approximate:
        return jax.nn.gelu(x, approximate=True)
    z = x * 0.7071067811865476
    a = jnp.abs(z)
    t = 1.0 / (1.0 + 0.3275911 * a)
    poly = t * (0.254829592 + t * (-0.284496736 + t * (1.421413741
               + t * (-1.453152027 + t * 1.061405429))))
    erf_abs = 1.0 - poly * jnp.exp(-a * a)
    erf = jnp.where(z < 0, -erf_abs, erf_abs)
    return 0.5 * x * (1.0 + erf)


def convatt_kernel(x_ref, wb_ref, o_ref, *, compute_dtype, approximate_gelu):
    """x_ref: (TB, L, TC); wb_ref: (20, TC) [taps k1|k3|k5|k7, then 4 biases];
    o_ref: (TB, L, TC).  Fully vectorized over the block -- no per-row loop."""
    dt = compute_dtype
    x = x_ref[...].astype(dt)                           # (TB, L, TC)
    TB, L, TC = x.shape

    # All 20 parameter rows loaded once per grid step and reused by every tap.
    wb = wb_ref[...].astype(dt)                         # (20, TC)

    # Zero halo along L, built once per block (amortized over TB batch rows).
    halo = jnp.zeros((TB, MAXPAD, TC), dt)
    xpad = jnp.concatenate([halo, x, halo], axis=1)     # (TB, L + 6, TC)

    # 7 unique sublane shifts, shared by all 16 taps.
    shifted = [xpad[:, off:off + L, :] for off in range(2 * MAXPAD + 1)]

    acc = x.astype(jnp.float32)                         # residual; final sum in f32
    row = 0
    for bidx, ksize in enumerate(KSIZES):
        pad = ksize // 2
        conv = None
        for t in range(ksize):
            w_t = wb[row + t, :][None, None, :]         # (1,1,TC), broadcast in the vmul
            term = shifted[MAXPAD - pad + t] * w_t
            conv = term if conv is None else conv + term
        conv = conv + wb[NTAPS + bidx, :][None, None, :]
        acc = acc + _gelu(conv, approximate_gelu).astype(jnp.float32)
        row += ksize

    o_ref[...] = acc.astype(o_ref.dtype)


def _device_kind():
    try:
        return jax.devices()[0].device_kind.lower()
    except Exception:
        return ""


def _default_compute_dtype(x_dtype):
    """bf16 math only for bf16 inputs on chips with bf16 VALU/EUP (v6e/v7x)."""
    if x_dtype != jnp.bfloat16:
        return jnp.float32
    kind = _device_kind()
    if any(tag in kind for tag in ("v6", "v7", "tpu7")):
        return jnp.bfloat16
    return jnp.float32            # v5e & older: no bf16 VPU/EUP -> keep f32


def _vmem_budgets():
    """(per-block working-set budget, vmem_limit_bytes) per chip generation."""
    kind = _device_kind()
    if "v7" in kind or "tpu7" in kind:
        return 10 * 1024 * 1024, 48 * 1024 * 1024       # 64 MiB physical VMEM
    return 24 * 1024 * 1024, 96 * 1024 * 1024           # v5e / v6e: 128 MiB


def _pick_tc(C):
    if C % 128 != 0:
        # Full channel dim (legal BlockSpec): avoids wrapper-side pad + unslice
        # (which would double the kernel's HBM traffic) at the cost of a masked
        # store on the last lanes.
        return C
    for tc in (512, 384, 256, 128):
        if C % tc == 0:
            return tc
    return 128


def _pick_tb(B, L, TC, in_itemsize, budget_bytes, c_steps, target_steps=8):
    # Working set per batch row: double-buffered in + out blocks at the input
    # dtype plus ~10 f32-sized temporaries (x, padded copy, 7 shifts, acc).
    per_b = L * TC * (4 * in_itemsize + 10 * 4)
    tb = max(1, min(B, budget_bytes // max(per_b, 1)))
    while B % tb:
        tb -= 1
    # Keep some grid depth for pipelining / v7x megacore when the shape allows.
    while tb > 1 and (B // tb) * c_steps < min(target_steps, B * c_steps):
        new_tb = tb // 2
        while new_tb > 1 and B % new_tb:
            new_tb -= 1
        tb = max(1, new_tb)
    return tb


def convatt_forward(x, weights, biases, *, approximate_gelu=False, compute_dtype=None):
    """x: (B, L, C). weights: {k: (C, k)}. biases: {k: (C,)}. Returns (B, L, C)."""
    B, L, C = x.shape
    if compute_dtype is None:
        compute_dtype = _default_compute_dtype(x.dtype)

    # Single packed parameter operand: rows 0..15 = taps [k1 | k3 | k5 | k7],
    # rows 16..19 = biases (one DMA stream instead of eight).
    w_rows = jnp.concatenate([weights[k].T for k in KSIZES], axis=0)     # (16, C)
    b_rows = jnp.stack([biases[k] for k in KSIZES], axis=0)              # (4, C)
    wb = jnp.concatenate([w_rows, b_rows], axis=0).astype(jnp.float32)   # (20, C)

    TC = _pick_tc(C)
    c_steps = C // TC
    budget_bytes, vmem_limit = _vmem_budgets()
    TB = _pick_tb(B, L, TC, jnp.dtype(x.dtype).itemsize, budget_bytes, c_steps)
    # Channel tiles on the OUTER grid axis so the wb tile's block index is
    # constant across the inner batch sweep (no parameter re-fetch per step).
    grid = (c_steps, B // TB)

    kernel = functools.partial(convatt_kernel,
                               compute_dtype=compute_dtype,
                               approximate_gelu=approximate_gelu)

    out = pl.pallas_call(
        kernel,
        out_shape=jax.ShapeDtypeStruct((B, L, C), x.dtype),
        grid=grid,
        in_specs=[
            pl.BlockSpec((TB, L, TC), lambda ci, bi: (bi, 0, ci)),
            pl.BlockSpec((WB_ROWS, TC), lambda ci, bi: (0, ci)),
        ],
        out_specs=pl.BlockSpec((TB, L, TC), lambda ci, bi: (bi, 0, ci)),
        compiler_params=pltpu.CompilerParams(
            dimension_semantics=("parallel", "parallel"),
            vmem_limit_bytes=vmem_limit,
        ),
    )(x, wb)
    return out


def convatt_reference(x, weights, biases, *, approximate_gelu=False):
    """Independent reference via lax.conv_general_dilated (matches PyTorch Conv1d)."""
    B, L, C = x.shape
    x_ncw = jnp.transpose(x, (0, 2, 1)).astype(jnp.float32)              # (B, C, L)
    out = x_ncw
    for k in KSIZES:
        rhs = weights[k][:, None, :]                                     # (C, 1, k) OIW
        pad = k // 2
        y = lax.conv_general_dilated(
            x_ncw, rhs, window_strides=(1,), padding=[(pad, pad)],
            dimension_numbers=("NCH", "OIH", "NCH"), feature_group_count=C)
        y = y + biases[k][None, :, None]
        out = out + jax.nn.gelu(y, approximate=approximate_gelu)
    return jnp.transpose(out, (0, 2, 1))                                 # (B, L, C)


if __name__ == "__main__":
    B, L, C = 2, 16, 120   # dim=120 matches the module default

    key = jax.random.PRNGKey(0)
    kx, *kws = jax.random.split(key, 1 + 2 * len(KSIZES))

    x = jax.random.normal(kx, (B, L, C), dtype=jnp.float32)

    # Deterministic parameter init mimicking PyTorch Conv1d (groups=C, fan_in=k):
    # uniform(-1/sqrt(k), 1/sqrt(k)) for both weight and bias.
    weights, biases = {}, {}
    for i, k in enumerate(KSIZES):
        bound = 1.0 / (k ** 0.5)
        weights[k] = jax.random.uniform(
            kws[2 * i], (C, k), minval=-bound, maxval=bound, dtype=jnp.float32)
        biases[k] = jax.random.uniform(
            kws[2 * i + 1], (C,), minval=-bound, maxval=bound, dtype=jnp.float32)

    # f32 run with the default exact-erf GELU (matches PyTorch nn.GELU).
    out = jax.block_until_ready(convatt_forward(x, weights, biases))
    assert out.shape == (B, L, C) and out.dtype == x.dtype

    ref = convatt_reference(x, weights, biases)
    err = float(jnp.abs(out - ref).max())
    assert jnp.allclose(out, ref, atol=1e-3, rtol=1e-3), err

    # bf16-in / bf16-out smoke test (HBM-traffic lever on v6e/v7x); in-kernel
    # math auto-selects bf16 on v6e/v7x and stays f32 on v5e.
    out_bf16 = jax.block_until_ready(
        convatt_forward(x.astype(jnp.bfloat16), weights, biases))
    assert out_bf16.dtype == jnp.bfloat16 and out_bf16.shape == (B, L, C)
    err_bf16 = float(jnp.abs(out_bf16.astype(jnp.float32) - ref).max())
    assert err_bf16 < 0.25, err_bf16

    print("KERNEL_OK")
</pallas_src>

<mosaic_0001>
module attributes {stable_mosaic.version = 11 : i64} {
  func.func @convatt_kernel(%arg0: i32, %arg1: i32, %arg2: memref<1x16x120xf32, #tpu.memory_space<vmem>>, %arg3: memref<20x120xf32, #tpu.memory_space<vmem>>, %arg4: memref<1x16x120xf32, #tpu.memory_space<vmem>>) attributes {dimension_semantics = [#tpu.dimension_semantics<parallel>, #tpu.dimension_semantics<parallel>], iteration_bounds = array<i64: 1, 2>, scalar_prefetch = 0 : i64, scratch_operands = 0 : i64, tpu.core_type = #tpu.core_type<tc>, window_params = [{transform_indices = @transform_0, window_bounds = array<i64: 1, 16, 120>}, {transform_indices = @transform_1, window_bounds = array<i64: 20, 120>}, {transform_indices = @transform_2, window_bounds = array<i64: 1, 16, 120>}]} {
    %c0 = arith.constant 0 : index
    %c0_0 = arith.constant 0 : index
    %c0_1 = arith.constant 0 : index
    %0 = vector.load %arg2[%c0, %c0_0, %c0_1] : memref<1x16x120xf32, #tpu.memory_space<vmem>>, vector<1x16x120xf32>
    %c0_2 = arith.constant 0 : index
    %c0_3 = arith.constant 0 : index
    %1 = vector.load %arg3[%c0_2, %c0_3] : memref<20x120xf32, #tpu.memory_space<vmem>>, vector<20x120xf32>
    %cst = arith.constant 0.000000e+00 : f32
    %2 = vector.broadcast %cst : f32 to vector<1x3x120xf32>
    %3 = tpu.concatenate %2, %0, %2 in 1 : vector<1x3x120xf32>, vector<1x16x120xf32>, vector<1x3x120xf32> -> vector<1x22x120xf32>
    %4 = vector.extract_strided_slice %3 {offsets = [0, 0, 0], sizes = [1, 16, 120], strides = [1, 1, 1]} : vector<1x22x120xf32> to vector<1x16x120xf32>
    %5 = vector.extract_strided_slice %3 {offsets = [0, 1, 0], sizes = [1, 16, 120], strides = [1, 1, 1]} : vector<1x22x120xf32> to vector<1x16x120xf32>
    %6 = vector.extract_strided_slice %3 {offsets = [0, 2, 0], sizes = [1, 16, 120], strides = [1, 1, 1]} : vector<1x22x120xf32> to vector<1x16x120xf32>
    %7 = vector.extract_strided_slice %3 {offsets = [0, 3, 0], sizes = [1, 16, 120], strides = [1, 1, 1]} : vector<1x22x120xf32> to vector<1x16x120xf32>
    %8 = vector.extract_strided_slice %3 {offsets = [0, 4, 0], sizes = [1, 16, 120], strides = [1, 1, 1]} : vector<1x22x120xf32> to vector<1x16x120xf32>
    %9 = vector.extract_strided_slice %3 {offsets = [0, 5, 0], sizes = [1, 16, 120], strides = [1, 1, 1]} : vector<1x22x120xf32> to vector<1x16x120xf32>
    %10 = vector.extract_strided_slice %3 {offsets = [0, 6, 0], sizes = [1, 16, 120], strides = [1, 1, 1]} : vector<1x22x120xf32> to vector<1x16x120xf32>
    %11 = vector.extract_strided_slice %1 {offsets = [0, 0], sizes = [1, 120], strides = [1, 1]} : vector<20x120xf32> to vector<1x120xf32>
    %12 = vector.shape_cast %11 : vector<1x120xf32> to vector<120xf32>
    %13 = vector.shape_cast %12 : vector<120xf32> to vector<1x1x120xf32>
    %14 = vector.broadcast %13 : vector<1x1x120xf32> to vector<1x16x120xf32>
    %15 = arith.mulf %7, %14 : vector<1x16x120xf32>
    %16 = vector.extract_strided_slice %1 {offsets = [16, 0], sizes = [1, 120], strides = [1, 1]} : vector<20x120xf32> to vector<1x120xf32>
    %17 = vector.shape_cast %16 : vector<1x120xf32> to vector<120xf32>
    %18 = vector.shape_cast %17 : vector<120xf32> to vector<1x1x120xf32>
    %19 = vector.broadcast %18 : vector<1x1x120xf32> to vector<1x16x120xf32>
    %20 = arith.addf %15, %19 : vector<1x16x120xf32>
    %cst_4 = arith.constant 0.707106769 : f32
    %21 = vector.broadcast %cst_4 : f32 to vector<1x16x120xf32>
    %22 = arith.mulf %20, %21 : vector<1x16x120xf32>
    %23 = math.absf %22 : vector<1x16x120xf32>
    %cst_5 = arith.constant 0.327591091 : f32
    %24 = vector.broadcast %cst_5 : f32 to vector<1x16x120xf32>
    %25 = arith.mulf %24, %23 : vector<1x16x120xf32>
    %cst_6 = arith.constant 1.000000e+00 : f32
    %26 = vector.broadcast %cst_6 : f32 to vector<1x16x120xf32>
    %27 = arith.addf %26, %25 : vector<1x16x120xf32>
    %cst_7 = arith.constant 1.000000e+00 : f32
    %28 = vector.broadcast %cst_7 : f32 to vector<1x16x120xf32>
    %29 = arith.divf %28, %27 : vector<1x16x120xf32>
    %cst_8 = arith.constant 1.06140542 : f32
    %30 = vector.broadcast %cst_8 : f32 to vector<1x16x120xf32>
    %31 = arith.mulf %29, %30 : vector<1x16x120xf32>
    %cst_9 = arith.constant -1.45315206 : f32
    %32 = vector.broadcast %cst_9 : f32 to vector<1x16x120xf32>
    %33 = arith.addf %32, %31 : vector<1x16x120xf32>
    %34 = arith.mulf %29, %33 : vector<1x16x120xf32>
    %cst_10 = arith.constant 1.42141378 : f32
    %35 = vector.broadcast %cst_10 : f32 to vector<1x16x120xf32>
    %36 = arith.addf %35, %34 : vector<1x16x120xf32>
    %37 = arith.mulf %29, %36 : vector<1x16x120xf32>
    %cst_11 = arith.constant -0.284496725 : f32
    %38 = vector.broadcast %cst_11 : f32 to vector<1x16x120xf32>
    %39 = arith.addf %38, %37 : vector<1x16x120xf32>
    %40 = arith.mulf %29, %39 : vector<1x16x120xf32>
    %cst_12 = arith.constant 0.254829586 : f32
    %41 = vector.broadcast %cst_12 : f32 to vector<1x16x120xf32>
    %42 = arith.addf %41, %40 : vector<1x16x120xf32>
    %43 = arith.mulf %29, %42 : vector<1x16x120xf32>
    %cst_13 = arith.constant 0.000000e+00 : f32
    %44 = vector.broadcast %cst_13 : f32 to vector<1x16x120xf32>
    %45 = arith.subf %44, %23 : vector<1x16x120xf32>
    %46 = arith.mulf %45, %23 : vector<1x16x120xf32>
    %47 = math.exp %46 : vector<1x16x120xf32>
    %48 = arith.mulf %43, %47 : vector<1x16x120xf32>
    %cst_14 = arith.constant 1.000000e+00 : f32
    %49 = vector.broadcast %cst_14 : f32 to vector<1x16x120xf32>
    %50 = arith.subf %49, %48 : vector<1x16x120xf32>
    %cst_15 = arith.constant 0.000000e+00 : f32
    %51 = vector.broadcast %cst_15 : f32 to vector<1x16x120xf32>
    %52 = arith.cmpf olt, %22, %51 : vector<1x16x120xf32>
    %cst_16 = arith.constant 0.000000e+00 : f32
    %53 = vector.broadcast %cst_16 : f32 to vector<1x16x120xf32>
    %54 = arith.subf %53, %50 : vector<1x16x120xf32>
    %55 = arith.select %52, %54, %50 : vector<1x16x120xi1>, vector<1x16x120xf32>
    %cst_17 = arith.constant 5.000000e-01 : f32
    %56 = vector.broadcast %cst_17 : f32 to vector<1x16x120xf32>
    %57 = arith.mulf %56, %20 : vector<1x16x120xf32>
    %cst_18 = arith.constant 1.000000e+00 : f32
    %58 = vector.broadcast %cst_18 : f32 to vector<1x16x120xf32>
    %59 = arith.addf %58, %55 : vector<1x16x120xf32>
    %60 = arith.mulf %57, %59 : vector<1x16x120xf32>
    %61 = arith.addf %0, %60 : vector<1x16x120xf32>
    %62 = vector.extract_strided_slice %1 {offsets = [1, 0], sizes = [1, 120], strides = [1, 1]} : vector<20x120xf32> to vector<1x120xf32>
    %63 = vector.shape_cast %62 : vector<1x120xf32> to vector<120xf32>
    %64 = vector.shape_cast %63 : vector<120xf32> to vector<1x1x120xf32>
    %65 = vector.broadcast %64 : vector<1x1x120xf32> to vector<1x16x120xf32>
    %66 = arith.mulf %6, %65 : vector<1x16x120xf32>
    %67 = vector.extract_strided_slice %1 {offsets = [2, 0], sizes = [1, 120], strides = [1, 1]} : vector<20x120xf32> to vector<1x120xf32>
    %68 = vector.shape_cast %67 : vector<1x120xf32> to vector<120xf32>
    %69 = vector.shape_cast %68 : vector<120xf32> to vector<1x1x120xf32>
    %70 = vector.broadcast %69 : vector<1x1x120xf32> to vector<1x16x120xf32>
    %71 = arith.mulf %7, %70 : vector<1x16x120xf32>
    %72 = arith.addf %66, %71 : vector<1x16x120xf32>
    %73 = vector.extract_strided_slice %1 {offsets = [3, 0], sizes = [1, 120], strides = [1, 1]} : vector<20x120xf32> to vector<1x120xf32>
    %74 = vector.shape_cast %73 : vector<1x120xf32> to vector<120xf32>
    %75 = vector.shape_cast %74 : vector<120xf32> to vector<1x1x120xf32>
    %76 = vector.broadcast %75 : vector<1x1x120xf32> to vector<1x16x120xf32>
    %77 = arith.mulf %8, %76 : vector<1x16x120xf32>
    %78 = arith.addf %72, %77 : vector<1x16x120xf32>
    %79 = vector.extract_strided_slice %1 {offsets = [17, 0], sizes = [1, 120], strides = [1, 1]} : vector<20x120xf32> to vector<1x120xf32>
    %80 = vector.shape_cast %79 : vector<1x120xf32> to vector<120xf32>
    %81 = vector.shape_cast %80 : vector<120xf32> to vector<1x1x120xf32>
    %82 = vector.broadcast %81 : vector<1x1x120xf32> to vector<1x16x120xf32>
    %83 = arith.addf %78, %82 : vector<1x16x120xf32>
    %cst_19 = arith.constant 0.707106769 : f32
    %84 = vector.broadcast %cst_19 : f32 to vector<1x16x120xf32>
    %85 = arith.mulf %83, %84 : vector<1x16x120xf32>
    %86 = math.absf %85 : vector<1x16x120xf32>
    %cst_20 = arith.constant 0.327591091 : f32
    %87 = vector.broadcast %cst_20 : f32 to vector<1x16x120xf32>
    %88 = arith.mulf %87, %86 : vector<1x16x120xf32>
    %cst_21 = arith.constant 1.000000e+00 : f32
    %89 = vector.broadcast %cst_21 : f32 to vector<1x16x120xf32>
    %90 = arith.addf %89, %88 : vector<1x16x120xf32>
    %cst_22 = arith.constant 1.000000e+00 : f32
    %91 = vector.broadcast %cst_22 : f32 to vector<1x16x120xf32>
    %92 = arith.divf %91, %90 : vector<1x16x120xf32>
    %cst_23 = arith.constant 1.06140542 : f32
    %93 = vector.broadcast %cst_23 : f32 to vector<1x16x120xf32>
    %94 = arith.mulf %92, %93 : vector<1x16x120xf32>
    %cst_24 = arith.constant -1.45315206 : f32
    %95 = vector.broadcast %cst_24 : f32 to vector<1x16x120xf32>
    %96 = arith.addf %95, %94 : vector<1x16x120xf32>
    %97 = arith.mulf %92, %96 : vector<1x16x120xf32>
    %cst_25 = arith.constant 1.42141378 : f32
    %98 = vector.broadcast %cst_25 : f32 to vector<1x16x120xf32>
    %99 = arith.addf %98, %97 : vector<1x16x120xf32>
    %100 = arith.mulf %92, %99 : vector<1x16x120xf32>
    %cst_26 = arith.constant -0.284496725 : f32
    %101 = vector.broadcast %cst_26 : f32 to vector<1x16x120xf32>
    %102 = arith.addf %101, %100 : vector<1x16x120xf32>
    %103 = arith.mulf %92, %102 : vector<1x16x120xf32>
    %cst_27 = arith.constant 0.254829586 : f32
    %104 = vector.broadcast %cst_27 : f32 to vector<1x16x120xf32>
    %105 = arith.addf %104, %103 : vector<1x16x120xf32>
    %106 = arith.mulf %92, %105 : vector<1x16x120xf32>
    %cst_28 = arith.constant 0.000000e+00 : f32
    %107 = vector.broadcast %cst_28 : f32 to vector<1x16x120xf32>
    %108 = arith.subf %107, %86 : vector<1x16x120xf32>
    %109 = arith.mulf %108, %86 : vector<1x16x120xf32>
    %110 = math.exp %109 : vector<1x16x120xf32>
    %111 = arith.mulf %106, %110 : vector<1x16x120xf32>
    %cst_29 = arith.constant 1.000000e+00 : f32
    %112 = vector.broadcast %cst_29 : f32 to vector<1x16x120xf32>
    %113 = arith.subf %112, %111 : vector<1x16x120xf32>
    %cst_30 = arith.constant 0.000000e+00 : f32
    %114 = vector.broadcast %cst_30 : f32 to vector<1x16x120xf32>
    %115 = arith.cmpf olt, %85, %114 : vector<1x16x120xf32>
    %cst_31 = arith.constant 0.000000e+00 : f32
    %116 = vector.broadcast %cst_31 : f32 to vector<1x16x120xf32>
    %117 = arith.subf %116, %113 : vector<1x16x120xf32>
    %118 = arith.select %115, %117, %113 : vector<1x16x120xi1>, vector<1x16x120xf32>
    %cst_32 = arith.constant 5.000000e-01 : f32
    %119 = vector.broadcast %cst_32 : f32 to vector<1x16x120xf32>
    %120 = arith.mulf %119, %83 : vector<1x16x120xf32>
    %cst_33 = arith.constant 1.000000e+00 : f32
    %121 = vector.broadcast %cst_33 : f32 to vector<1x16x120xf32>
    %122 = arith.addf %121, %118 : vector<1x16x120xf32>
    %123 = arith.mulf %120, %122 : vector<1x16x120xf32>
    %124 = arith.addf %61, %123 : vector<1x16x120xf32>
    %125 = vector.extract_strided_slice %1 {offsets = [4, 0], sizes = [1, 120], strides = [1, 1]} : vector<20x120xf32> to vector<1x120xf32>
    %126 = vector.shape_cast %125 : vector<1x120xf32> to vector<120xf32>
    %127 = vector.shape_cast %126 : vector<120xf32> to vector<1x1x120xf32>
    %128 = vector.broadcast %127 : vector<1x1x120xf32> to vector<1x16x120xf32>
    %129 = arith.mulf %5, %128 : vector<1x16x120xf32>
    %130 = vector.extract_strided_slice %1 {offsets = [5, 0], sizes = [1, 120], strides = [1, 1]} : vector<20x120xf32> to vector<1x120xf32>
    %131 = vector.shape_cast %130 : vector<1x120xf32> to vector<120xf32>
    %132 = vector.shape_cast %131 : vector<120xf32> to vector<1x1x120xf32>
    %133 = vector.broadcast %132 : vector<1x1x120xf32> to vector<1x16x120xf32>
    %134 = arith.mulf %6, %133 : vector<1x16x120xf32>
    %135 = arith.addf %129, %134 : vector<1x16x120xf32>
    %136 = vector.extract_strided_slice %1 {offsets = [6, 0], sizes = [1, 120], strides = [1, 1]} : vector<20x120xf32> to vector<1x120xf32>
    %137 = vector.shape_cast %136 : vector<1x120xf32> to vector<120xf32>
    %138 = vector.shape_cast %137 : vector<120xf32> to vector<1x1x120xf32>
    %139 = vector.broadcast %138 : vector<1x1x120xf32> to vector<1x16x120xf32>
    %140 = arith.mulf %7, %139 : vector<1x16x120xf32>
    %141 = arith.addf %135, %140 : vector<1x16x120xf32>
    %142 = vector.extract_strided_slice %1 {offsets = [7, 0], sizes = [1, 120], strides = [1, 1]} : vector<20x120xf32> to vector<1x120xf32>
    %143 = vector.shape_cast %142 : vector<1x120xf32> to vector<120xf32>
    %144 = vector.shape_cast %143 : vector<120xf32> to vector<1x1x120xf32>
    %145 = vector.broadcast %144 : vector<1x1x120xf32> to vector<1x16x120xf32>
    %146 = arith.mulf %8, %145 : vector<1x16x120xf32>
    %147 = arith.addf %141, %146 : vector<1x16x120xf32>
    %148 = vector.extract_strided_slice %1 {offsets = [8, 0], sizes = [1, 120], strides = [1, 1]} : vector<20x120xf32> to vector<1x120xf32>
    %149 = vector.shape_cast %148 : vector<1x120xf32> to vector<120xf32>
    %150 = vector.shape_cast %149 : vector<120xf32> to vector<1x1x120xf32>
    %151 = vector.broadcast %150 : vector<1x1x120xf32> to vector<1x16x120xf32>
    %152 = arith.mulf %9, %151 : vector<1x16x120xf32>
    %153 = arith.addf %147, %152 : vector<1x16x120xf32>
    %154 = vector.extract_strided_slice %1 {offsets = [18, 0], sizes = [1, 120], strides = [1, 1]} : vector<20x120xf32> to vector<1x120xf32>
    %155 = vector.shape_cast %154 : vector<1x120xf32> to vector<120xf32>
    %156 = vector.shape_cast %155 : vector<120xf32> to vector<1x1x120xf32>
    %157 = vector.broadcast %156 : vector<1x1x120xf32> to vector<1x16x120xf32>
    %158 = arith.addf %153, %157 : vector<1x16x120xf32>
    %cst_34 = arith.constant 0.707106769 : f32
    %159 = vector.broadcast %cst_34 : f32 to vector<1x16x120xf32>
    %160 = arith.mulf %158, %159 : vector<1x16x120xf32>
    %161 = math.absf %160 : vector<1x16x120xf32>
    %cst_35 = arith.constant 0.327591091 : f32
    %162 = vector.broadcast %cst_35 : f32 to vector<1x16x120xf32>
    %163 = arith.mulf %162, %161 : vector<1x16x120xf32>
    %cst_36 = arith.constant 1.000000e+00 : f32
    %164 = vector.broadcast %cst_36 : f32 to vector<1x16x120xf32>
    %165 = arith.addf %164, %163 : vector<1x16x120xf32>
    %cst_37 = arith.constant 1.000000e+00 : f32
    %166 = vector.broadcast %cst_37 : f32 to vector<1x16x120xf32>
    %167 = arith.divf %166, %165 : vector<1x16x120xf32>
    %cst_38 = arith.constant 1.06140542 : f32
    %168 = vector.broadcast %cst_38 : f32 to vector<1x16x120xf32>
    %169 = arith.mulf %167, %168 : vector<1x16x120xf32>
    %cst_39 = arith.constant -1.45315206 : f32
    %170 = vector.broadcast %cst_39 : f32 to vector<1x16x120xf32>
    %171 = arith.addf %170, %169 : vector<1x16x120xf32>
    %172 = arith.mulf %167, %171 : vector<1x16x120xf32>
    %cst_40 = arith.constant 1.42141378 : f32
    %173 = vector.broadcast %cst_40 : f32 to vector<1x16x120xf32>
    %174 = arith.addf %173, %172 : vector<1x16x120xf32>
    %175 = arith.mulf %167, %174 : vector<1x16x120xf32>
    %cst_41 = arith.constant -0.284496725 : f32
    %176 = vector.broadcast %cst_41 : f32 to vector<1x16x120xf32>
    %177 = arith.addf %176, %175 : vector<1x16x120xf32>
    %178 = arith.mulf %167, %177 : vector<1x16x120xf32>
    %cst_42 = arith.constant 0.254829586 : f32
    %179 = vector.broadcast %cst_42 : f32 to vector<1x16x120xf32>
    %180 = arith.addf %179, %178 : vector<1x16x120xf32>
    %181 = arith.mulf %167, %180 : vector<1x16x120xf32>
    %cst_43 = arith.constant 0.000000e+00 : f32
    %182 = vector.broadcast %cst_43 : f32 to vector<1x16x120xf32>
    %183 = arith.subf %182, %161 : vector<1x16x120xf32>
    %184 = arith.mulf %183, %161 : vector<1x16x120xf32>
    %185 = math.exp %184 : vector<1x16x120xf32>
    %186 = arith.mulf %181, %185 : vector<1x16x120xf32>
    %cst_44 = arith.constant 1.000000e+00 : f32
    %187 = vector.broadcast %cst_44 : f32 to vector<1x16x120xf32>
    %188 = arith.subf %187, %186 : vector<1x16x120xf32>
    %cst_45 = arith.constant 0.000000e+00 : f32
    %189 = vector.broadcast %cst_45 : f32 to vector<1x16x120xf32>
    %190 = arith.cmpf olt, %160, %189 : vector<1x16x120xf32>
    %cst_46 = arith.constant 0.000000e+00 : f32
    %191 = vector.broadcast %cst_46 : f32 to vector<1x16x120xf32>
    %192 = arith.subf %191, %188 : vector<1x16x120xf32>
    %193 = arith.select %190, %192, %188 : vector<1x16x120xi1>, vector<1x16x120xf32>
    %cst_47 = arith.constant 5.000000e-01 : f32
    %194 = vector.broadcast %cst_47 : f32 to vector<1x16x120xf32>
    %195 = arith.mulf %194, %158 : vector<1x16x120xf32>
    %cst_48 = arith.constant 1.000000e+00 : f32
    %196 = vector.broadcast %cst_48 : f32 to vector<1x16x120xf32>
    %197 = arith.addf %196, %193 : vector<1x16x120xf32>
    %198 = arith.mulf %195, %197 : vector<1x16x120xf32>
    %199 = arith.addf %124, %198 : vector<1x16x120xf32>
    %200 = vector.extract_strided_slice %1 {offsets = [9, 0], sizes = [1, 120], strides = [1, 1]} : vector<20x120xf32> to vector<1x120xf32>
    %201 = vector.shape_cast %200 : vector<1x120xf32> to vector<120xf32>
    %202 = vector.shape_cast %201 : vector<120xf32> to vector<1x1x120xf32>
    %203 = vector.broadcast %202 : vector<1x1x120xf32> to vector<1x16x120xf32>
    %204 = arith.mulf %4, %203 : vector<1x16x120xf32>
    %205 = vector.extract_strided_slice %1 {offsets = [10, 0], sizes = [1, 120], strides = [1, 1]} : vector<20x120xf32> to vector<1x120xf32>
    %206 = vector.shape_cast %205 : vector<1x120xf32> to vector<120xf32>
    %207 = vector.shape_cast %206 : vector<120xf32> to vector<1x1x120xf32>
    %208 = vector.broadcast %207 : vector<1x1x120xf32> to vector<1x16x120xf32>
    %209 = arith.mulf %5, %208 : vector<1x16x120xf32>
    %210 = arith.addf %204, %209 : vector<1x16x120xf32>
    %211 = vector.extract_strided_slice %1 {offsets = [11, 0], sizes = [1, 120], strides = [1, 1]} : vector<20x120xf32> to vector<1x120xf32>
    %212 = vector.shape_cast %211 : vector<1x120xf32> to vector<120xf32>
    %213 = vector.shape_cast %212 : vector<120xf32> to vector<1x1x120xf32>
    %214 = vector.broadcast %213 : vector<1x1x120xf32> to vector<1x16x120xf32>
    %215 = arith.mulf %6, %214 : vector<1x16x120xf32>
    %216 = arith.addf %210, %215 : vector<1x16x120xf32>
    %217 = vector.extract_strided_slice %1 {offsets = [12, 0], sizes = [1, 120], strides = [1, 1]} : vector<20x120xf32> to vector<1x120xf32>
    %218 = vector.shape_cast %217 : vector<1x120xf32> to vector<120xf32>
    %219 = vector.shape_cast %218 : vector<120xf32> to vector<1x1x120xf32>
    %220 = vector.broadcast %219 : vector<1x1x120xf32> to vector<1x16x120xf32>
    %221 = arith.mulf %7, %220 : vector<1x16x120xf32>
    %222 = arith.addf %216, %221 : vector<1x16x120xf32>
    %223 = vector.extract_strided_slice %1 {offsets = [13, 0], sizes = [1, 120], strides = [1, 1]} : vector<20x120xf32> to vector<1x120xf32>
    %224 = vector.shape_cast %223 : vector<1x120xf32> to vector<120xf32>
    %225 = vector.shape_cast %224 : vector<120xf32> to vector<1x1x120xf32>
    %226 = vector.broadcast %225 : vector<1x1x120xf32> to vector<1x16x120xf32>
    %227 = arith.mulf %8, %226 : vector<1x16x120xf32>
    %228 = arith.addf %222, %227 : vector<1x16x120xf32>
    %229 = vector.extract_strided_slice %1 {offsets = [14, 0], sizes = [1, 120], strides = [1, 1]} : vector<20x120xf32> to vector<1x120xf32>
    %230 = vector.shape_cast %229 : vector<1x120xf32> to vector<120xf32>
    %231 = vector.shape_cast %230 : vector<120xf32> to vector<1x1x120xf32>
    %232 = vector.broadcast %231 : vector<1x1x120xf32> to vector<1x16x120xf32>
    %233 = arith.mulf %9, %232 : vector<1x16x120xf32>
    %234 = arith.addf %228, %233 : vector<1x16x120xf32>
    %235 = vector.extract_strided_slice %1 {offsets = [15, 0], sizes = [1, 120], strides = [1, 1]} : vector<20x120xf32> to vector<1x120xf32>
    %236 = vector.shape_cast %235 : vector<1x120xf32> to vector<120xf32>
    %237 = vector.shape_cast %236 : vector<120xf32> to vector<1x1x120xf32>
    %238 = vector.broadcast %237 : vector<1x1x120xf32> to vector<1x16x120xf32>
    %239 = arith.mulf %10, %238 : vector<1x16x120xf32>
    %240 = arith.addf %234, %239 : vector<1x16x120xf32>
    %241 = vector.extract_strided_slice %1 {offsets = [19, 0], sizes = [1, 120], strides = [1, 1]} : vector<20x120xf32> to vector<1x120xf32>
    %242 = vector.shape_cast %241 : vector<1x120xf32> to vector<120xf32>
    %243 = vector.shape_cast %242 : vector<120xf32> to vector<1x1x120xf32>
    %244 = vector.broadcast %243 : vector<1x1x120xf32> to vector<1x16x120xf32>
    %245 = arith.addf %240, %244 : vector<1x16x120xf32>
    %cst_49 = arith.constant 0.707106769 : f32
    %246 = vector.broadcast %cst_49 : f32 to vector<1x16x120xf32>
    %247 = arith.mulf %245, %246 : vector<1x16x120xf32>
    %248 = math.absf %247 : vector<1x16x120xf32>
    %cst_50 = arith.constant 0.327591091 : f32
    %249 = vector.broadcast %cst_50 : f32 to vector<1x16x120xf32>
    %250 = arith.mulf %249, %248 : vector<1x16x120xf32>
    %cst_51 = arith.constant 1.000000e+00 : f32
    %251 = vector.broadcast %cst_51 : f32 to vector<1x16x120xf32>
    %252 = arith.addf %251, %250 : vector<1x16x120xf32>
    %cst_52 = arith.constant 1.000000e+00 : f32
    %253 = vector.broadcast %cst_52 : f32 to vector<1x16x120xf32>
    %254 = arith.divf %253, %252 : vector<1x16x120xf32>
    %cst_53 = arith.constant 1.06140542 : f32
    %255 = vector.broadcast %cst_53 : f32 to vector<1x16x120xf32>
    %256 = arith.mulf %254, %255 : vector<1x16x120xf32>
    %cst_54 = arith.constant -1.45315206 : f32
    %257 = vector.broadcast %cst_54 : f32 to vector<1x16x120xf32>
    %258 = arith.addf %257, %256 : vector<1x16x120xf32>
    %259 = arith.mulf %254, %258 : vector<1x16x120xf32>
    %cst_55 = arith.constant 1.42141378 : f32
    %260 = vector.broadcast %cst_55 : f32 to vector<1x16x120xf32>
    %261 = arith.addf %260, %259 : vector<1x16x120xf32>
    %262 = arith.mulf %254, %261 : vector<1x16x120xf32>
    %cst_56 = arith.constant -0.284496725 : f32
    %263 = vector.broadcast %cst_56 : f32 to vector<1x16x120xf32>
    %264 = arith.addf %263, %262 : vector<1x16x120xf32>
    %265 = arith.mulf %254, %264 : vector<1x16x120xf32>
    %cst_57 = arith.constant 0.254829586 : f32
    %266 = vector.broadcast %cst_57 : f32 to vector<1x16x120xf32>
    %267 = arith.addf %266, %265 : vector<1x16x120xf32>
    %268 = arith.mulf %254, %267 : vector<1x16x120xf32>
    %cst_58 = arith.constant 0.000000e+00 : f32
    %269 = vector.broadcast %cst_58 : f32 to vector<1x16x120xf32>
    %270 = arith.subf %269, %248 : vector<1x16x120xf32>
    %271 = arith.mulf %270, %248 : vector<1x16x120xf32>
    %272 = math.exp %271 : vector<1x16x120xf32>
    %273 = arith.mulf %268, %272 : vector<1x16x120xf32>
    %cst_59 = arith.constant 1.000000e+00 : f32
    %274 = vector.broadcast %cst_59 : f32 to vector<1x16x120xf32>
    %275 = arith.subf %274, %273 : vector<1x16x120xf32>
    %cst_60 = arith.constant 0.000000e+00 : f32
    %276 = vector.broadcast %cst_60 : f32 to vector<1x16x120xf32>
    %277 = arith.cmpf olt, %247, %276 : vector<1x16x120xf32>
    %cst_61 = arith.constant 0.000000e+00 : f32
    %278 = vector.broadcast %cst_61 : f32 to vector<1x16x120xf32>
    %279 = arith.subf %278, %275 : vector<1x16x120xf32>
    %280 = arith.select %277, %279, %275 : vector<1x16x120xi1>, vector<1x16x120xf32>
    %cst_62 = arith.constant 5.000000e-01 : f32
    %281 = vector.broadcast %cst_62 : f32 to vector<1x16x120xf32>
    %282 = arith.mulf %281, %245 : vector<1x16x120xf32>
    %cst_63 = arith.constant 1.000000e+00 : f32
    %283 = vector.broadcast %cst_63 : f32 to vector<1x16x120xf32>
    %284 = arith.addf %283, %280 : vector<1x16x120xf32>
    %285 = arith.mulf %282, %284 : vector<1x16x120xf32>
    %286 = arith.addf %199, %285 : vector<1x16x120xf32>
    %c0_64 = arith.constant 0 : index
    %c0_65 = arith.constant 0 : index
    %c0_66 = arith.constant 0 : index
    %287 = vector.load %arg4[%c0_64, %c0_65, %c0_66] : memref<1x16x120xf32, #tpu.memory_space<vmem>>, vector<1x16x120xf32>
    tpu.vector_store %arg4[%c0_64, %c0_65, %c0_66], %286 {strides = array<i32>} : memref<1x16x120xf32, #tpu.memory_space<vmem>>, vector<1x16x120xf32>,
    return
  }
  func.func @transform_0(%arg0: i32, %arg1: i32) -> (i32, i32, i32) {
    %c0_i32 = arith.constant 0 : i32
    %c0_i32_0 = arith.constant 0 : i32
    return %arg1, %c0_i32, %arg0 : i32, i32, i32
  }
  func.func @transform_1(%arg0: i32, %arg1: i32) -> (i32, i32) {
    %c0_i32 = arith.constant 0 : i32
    %c0_i32_0 = arith.constant 0 : i32
    return %c0_i32, %arg0 : i32, i32
  }
  func.func @transform_2(%arg0: i32, %arg1: i32) -> (i32, i32, i32) {
    %c0_i32 = arith.constant 0 : i32
    %c0_i32_0 = arith.constant 0 : i32
    return %arg1, %c0_i32, %arg0 : i32, i32, i32
  }
}

</mosaic_0001>

<llo_original>
// kernel: tpu_custom_call.1
$region0: #{tpu_custom_call.1}
  #allocation0 [shape = 'u32[]', space=smem, size = 0x4, offset = 0x4, fixed_abs, tag = 'smem constant byte address 0x4 - core index']
  #allocation1 [shape = 'u32[144,128]{1,0:T(1,128)}', space=vmem, size = 0x12000, scoped, tag = 'internal scratch']
  %s0 = inlined_call_operand.hbm [shape: f32[2,16,120], index: 0, kind: input, shape index: {}]
  %s1 = inlined_call_operand.hbm [shape: f32[20,120], index: 1, kind: input, shape index: {}]
  %s2 = inlined_call_operand.hbm [shape: f32[2,16,120], index: 2, kind: output, shape index: {}]
  %s3 = sld [smem:[#allocation0]]
  $region49: #{tpu_custom_call.1} parent=0
    _
  %s5 = ssub.s32 1, %s3
  %s6 = scalar_select 0, %s5, %s3
  $region1: #{tpu_custom_call.1} parent=0
    #allocation2 [shape = 'u8[16384]{0}', space=vmem, size = 0x4000, scoped, tag = 'input window, operand 0']
    #allocation3 [shape = 's32[2]{0}', space=sflag, size = 0x8, scoped, tag = 'scoped memory for tpu_custom_call.1']
    #allocation4 [shape = 's32[2]{0}', space=sflag, size = 0x8, scoped, tag = 'scoped memory for tpu_custom_call.1']
    #allocation5 [shape = 'u8[12288]{0}', space=vmem, size = 0x3000, scoped, tag = 'input window, operand 1, single buffered']
    #allocation6 [shape = 's32[1]{0}', space=sflag, size = 0x4, scoped, tag = 'scoped memory for tpu_custom_call.1']
    #allocation7 [shape = 'u8[16384]{0}', space=vmem, size = 0x4000, scoped, tag = 'output window, operand 0']
    %7 = vsyncpa [#allocation3], 0
    %s8 = scalar_lea.sflag [#allocation3], 1
    %9 = vsyncpa %s8, 0
    %10 = vsyncpa [#allocation6], 0
    %11 = vsyncpa [#allocation4], 0
    %s12 = scalar_lea.sflag [#allocation4], 1
    %13 = vsyncpa %s12, 0
    loop: start=0, step=1, limit=4
    $region2: #{tpu_custom_call.1} parent=1 // loop_pre_header
      _
    $region3: #{tpu_custom_call.1} parent=1 // loop_header
      %s15 = sphi 0, %s19
      %p16 = scmp.ge.s32.totalorder %s15, 4
      %s22 = sphi 0, %s34
      %s23 = sphi 0, %s30
      %s24 = sphi 0, %s22
      %s25 = sphi 0, %s23
      %s26 = sphi 0, %s24
      %s27 = sphi 0, %s25
      %s39 = sphi 0, %s41
      %s42 = sphi 0, %s39
      %s43 = sphi 0, %s42
      %s59 = sphi 0, %s43
      %s65 = sphi 0, %s67
      %s68 = sphi 0, %s65
      %s69 = sphi 0, %s68
      %s85 = sphi 0, %s69
      %s93 = sphi 0, %s95
      %s96 = sphi 0, %s93
      %s97 = sphi 0, %s96
      %s113 = sphi 0, %s97
    $region4: #{tpu_custom_call.1} parent=1 // loop_header_branch
      %18 = sbr.rel (%p16) target = $region8
    $region5: #{tpu_custom_call.1} parent=1 // loop_body
      %s20 = ssub.s32 %s15, 1
      %s21 = ssub.s32 %s15, 2
      %s28 = sadd.s32 1, %s23
      %p29 = scmp.ge.s32.totalorder %s28, 2
      %s30 = scalar_select %p29, 0, %s28
      %s31 = sadd.s32 1, %s22
      %s32 = scalar_select %p29, %s31, %s22
      %p33 = scmp.ge.s32.totalorder %s32, 1
      %s34 = scalar_select %p33, 0, %s32
      %s35 = ssub.s32 %s23, %s30
      %s36 = ssub.s32 %s22, %s34
      %s37 = sor.u32 %s35, %s36
      %p38 = scmp.eq.s32.totalorder %s37, 0
      %s40 = sadd.s32 %s39, 1
      %s41 = scalar_select %p38, %s39, %s40
      %p44 = pneg %p38
      %p45 = scmp.eq.s32.totalorder %s15, 1
      %p46 = por %p44, %p45
      %p47 = scmp.ne.s32.totalorder %s39, %s42
      %p48 = scmp.eq.s32.totalorder %s15, 0
      %p49 = por %p47, %p48
      %p50 = scmp.ne.s32.totalorder %s39, %s42
      %p51 = scmp.eq.s32.totalorder %s20, 1
      %p52 = por %p50, %p51
      %p53 = scmp.ne.s32.totalorder %s42, %s43
      %p54 = scmp.eq.s32.totalorder %s20, 0
      %p55 = por %p53, %p54
      %p56 = scmp.ne.s32.totalorder %s42, %s43
      %p57 = scmp.eq.s32.totalorder %s21, 1
      %p58 = por %p56, %p57
      %p60 = scmp.ne.s32.totalorder %s43, %s59
      %p61 = scmp.eq.s32.totalorder %s21, 0
      %p62 = por %p60, %p61
      %s63 = ssub.s32 %s22, %s34
      %p64 = scmp.eq.s32.totalorder %s63, 0
      %s66 = sadd.s32 %s65, 1
      %s67 = scalar_select %p64, %s65, %s66
      %p70 = pneg %p64
      %p71 = scmp.eq.s32.totalorder %s15, 1
      %p72 = por %p70, %p71
      %p73 = scmp.ne.s32.totalorder %s65, %s68
      %p74 = scmp.eq.s32.totalorder %s15, 0
      %p75 = por %p73, %p74
      %p76 = scmp.ne.s32.totalorder %s65, %s68
      %p77 = scmp.eq.s32.totalorder %s20, 1
      %p78 = por %p76, %p77
      %p79 = scmp.ne.s32.totalorder %s68, %s69
      %p80 = scmp.eq.s32.totalorder %s20, 0
      %p81 = por %p79, %p80
      %p82 = scmp.ne.s32.totalorder %s68, %s69
      %p83 = scmp.eq.s32.totalorder %s21, 1
      %p84 = por %p82, %p83
      %p86 = scmp.ne.s32.totalorder %s69, %s85
      %p87 = scmp.eq.s32.totalorder %s21, 0
      %p88 = por %p86, %p87
      %s89 = ssub.s32 %s23, %s30
      %s90 = ssub.s32 %s22, %s34
      %s91 = sor.u32 %s89, %s90
      %p92 = scmp.eq.s32.totalorder %s91, 0
      %s94 = sadd.s32 %s93, 1
      %s95 = scalar_select %p92, %s93, %s94
      %p98 = pneg %p92
      %p99 = scmp.eq.s32.totalorder %s15, 1
      %p100 = por %p98, %p99
      %p101 = scmp.ne.s32.totalorder %s93, %s96
      %p102 = scmp.eq.s32.totalorder %s15, 0
      %p103 = por %p101, %p102
      %p104 = scmp.ne.s32.totalorder %s93, %s96
      %p105 = scmp.eq.s32.totalorder %s20, 1
      %p106 = por %p104, %p105
      %p107 = scmp.ne.s32.totalorder %s96, %s97
      %p108 = scmp.eq.s32.totalorder %s20, 0
      %p109 = por %p107, %p108
      %p110 = scmp.ne.s32.totalorder %s96, %s97
      %p111 = scmp.eq.s32.totalorder %s21, 1
      %p112 = por %p110, %p111
      %p114 = scmp.ne.s32.totalorder %s97, %s113
      %p115 = scmp.eq.s32.totalorder %s21, 0
      %p116 = por %p114, %p115
      %p117 = scmp.le.s32.totalorder 1, %s15
      %p118 = scmp.lt.s32.totalorder %s15, 3
      %p119 = pnand %p117, %p118
      %p120 = pneg %p119
      // Predicated region
      $region9: #{tpu_custom_call.1} parent=5 // pred_check
        _
      $region10: #{tpu_custom_call.1} parent=5 // pred_check_branch
        %122 = sbr.rel (%p119) target = $region12
      $region11: #{tpu_custom_call.1} parent=5 // pred_region
        %s123 = ssub.s32 %s15, 1
        // Predicated region
        $region13: #{tpu_custom_call.1} parent=11 // pred_check
          %p124 = pneg %p81
        $region14: #{tpu_custom_call.1} parent=11 // pred_check_branch
          %126 = sbr.rel (%p124) target = $region16
        $region15: #{tpu_custom_call.1} parent=11 // pred_region
          %s128 = ssub.s32 384, 384
          %129 = vsyncadd [#allocation6], %s128
          %s130 = smul.addr %s24, 128
          %s131 = scalar_lea.hbm %s1, %s130
          %s132 = sshll.u32 [#allocation5], 4
          %s133 = int_to_ptr.vmem [resolvable:$true] %s132
          %138 = dma.hbm_to_vmem [thread:$0]  %s131, 384, %s133, [#allocation6], 128, 128, 8
        $region16: #{tpu_custom_call.1} parent=11 // pred_fallthru
          _
      $region12: #{tpu_custom_call.1} parent=5 // pred_fallthru
        _
      %p139 = scmp.lt.s32.totalorder %s15, 2
      // Predicated region
      $region17: #{tpu_custom_call.1} parent=5 // pred_check
        %p140 = pneg %p139
      $region18: #{tpu_custom_call.1} parent=5 // pred_check_branch
        %142 = sbr.rel (%p140) target = $region20
      $region19: #{tpu_custom_call.1} parent=5 // pred_region
        // Predicated region
        $region21: #{tpu_custom_call.1} parent=19 // pred_check
          %p143 = pneg %p49
        $region22: #{tpu_custom_call.1} parent=19 // pred_check_branch
          %145 = sbr.rel (%p143) target = $region24
        $region23: #{tpu_custom_call.1} parent=19 // pred_region
          %s146 = sand.u32 %s39, 1
          %s147 = scalar_lea.sflag [#allocation3], %s146
          %s148 = sand.u32 %s39, 1
          %s149 = smul.addr %s148, 16
          %s150 = scalar_lea.vmem [#allocation2], %s149
          %s152 = ssub.s32 256, 256
          %153 = vsyncadd %s147, %s152
          %s154 = smul.addr %s23, 2
          %s155 = sadd.s32 %s22, %s154
          %s156 = smul.addr %s155, 128
          %s157 = scalar_lea.hbm %s0, %s156
          %s158 = sshll.u32 %s150, 4
          %s159 = int_to_ptr.vmem [resolvable:$true] %s158
          %164 = dma.hbm_to_vmem [thread:$0]  %s157, 256, %s159, %s147, 128, 128, 8
        $region24: #{tpu_custom_call.1} parent=19 // pred_fallthru
          _
      $region20: #{tpu_custom_call.1} parent=5 // pred_fallthru
        _
      %p165 = scmp.le.s32.totalorder 1, %s15
      %p166 = scmp.lt.s32.totalorder %s15, 3
      %p167 = pnand %p165, %p166
      %p168 = pneg %p167
      // Predicated region
      $region25: #{tpu_custom_call.1} parent=5 // pred_check
        _
      $region26: #{tpu_custom_call.1} parent=5 // pred_check_branch
        %170 = sbr.rel (%p167) target = $region28
      $region27: #{tpu_custom_call.1} parent=5 // pred_region
        %s171 = ssub.s32 %s15, 1
        %s172 = sand.u32 %s42, 1
        %s173 = scalar_lea.sflag [#allocation3], %s172
        %s174 = sand.u32 %s42, 1
        %s175 = smul.addr %s174, 16
        %s176 = scalar_lea.vmem [#allocation2], %s175
        // Predicated region
        $region29: #{tpu_custom_call.1} parent=27 // pred_check
          %p177 = pneg %p55
        $region30: #{tpu_custom_call.1} parent=27 // pred_check_branch
          %179 = sbr.rel (%p177) target = $region32
        $region31: #{tpu_custom_call.1} parent=27 // pred_region
          %180 = dma.done %s173, 256
        $region32: #{tpu_custom_call.1} parent=27 // pred_fallthru
          _
        // Predicated region
        $region33: #{tpu_custom_call.1} parent=27 // pred_check
          %p181 = pneg %p81
        $region34: #{tpu_custom_call.1} parent=27 // pred_check_branch
          %183 = sbr.rel (%p181) target = $region36
        $region35: #{tpu_custom_call.1} parent=27 // pred_region
          %184 = dma.done [#allocation6], 384
        $region36: #{tpu_custom_call.1} parent=27 // pred_fallthru
          _
        %s185 = sand.u32 %s42, 1
        %s186 = scalar_lea.sflag [#allocation3], %s185
        %s187 = sand.u32 %s42, 1
        %s188 = smul.addr %s187, 16
        %s189 = scalar_lea.vmem [#allocation2], %s188
        %p190 = pneg %p55
        %p191 = pneg %p52
        %p192 = pneg %p81
        %p193 = pneg %p78
        %p194 = pneg %p109
        %p195 = pneg %p106
        %s196 = sand.u32 %s96, 1
        %s197 = scalar_lea.sflag [#allocation4], %s196
        %s198 = sand.u32 %s96, 1
        %s199 = smul.addr %s198, 16
        %s200 = scalar_lea.vmem [#allocation7], %s199
        %v201 = vld [vmem:[%s176] sm:$0xff]
        %v202 = vld [vmem:[%s176 + $0x8] sm:$0xff]
        %v203 = vld [vmem:[#allocation5] sm:$0xff]
        %v204 = vld [vmem:[#allocation5 + $0x8] sm:$0xff]
        %v205 = vld [vmem:[#allocation5 + $0x10] sm:$0xf]
        %vm208 = vcmask 1042432
        %v209 = vrot.slane %v201, 5
        %v210 = vrot.slane %v202, 5
        %v211 = vsel %vm208, %v209, %v210
        %v215 = vsel %vm208, 0.0, %v209
        %v216 = vsel %vm208, %v210, 0.0
        %v217 = vlaneseq
        %v218 = vshrl.u32 %v217, 7
        %v219 = vsub.s32 0, %v218
        %v220 = vrot.slane %v203, %v219
        %v221 = vmul.f32 %v215, %v220
        %v222 = vmul.f32 %v211, %v220
        %v223 = vmul.f32 %v216, %v220
        %v224 = vlaneseq
        %v225 = vshrl.u32 %v224, 7
        %v226 = vsub.s32 0, %v225
        %v227 = vrot.slane %v205, %v226
        %v228 = vadd.f32 %v221, %v227
        %v229 = vadd.f32 %v222, %v227
        %v230 = vadd.f32 %v223, %v227
        %v231 = vmul.f32 %v228, 0.70710677
        %v232 = vmul.f32 %v229, 0.70710677
        %v233 = vmul.f32 %v230, 0.70710677
        %v234 = vand.u32 2147483647, %v231
        %v235 = vand.u32 2147483647, %v232
        %v236 = vand.u32 2147483647, %v233
        %v237 = vmul.f32 %v234, 0.3275911
        %v238 = vmul.f32 %v235, 0.3275911
        %v239 = vmul.f32 %v236, 0.3275911
        %v240 = vadd.f32 %v237, 1.0
        %v241 = vadd.f32 %v238, 1.0
        %v242 = vadd.f32 %v239, 1.0
        %v243 = vrcp.pop %v240
        %v244 = vmul.f32 1.0, %v243
        %v245 = vrcp.pop %v241
        %v246 = vmul.f32 1.0, %v245
        %v247 = vrcp.pop %v242
        %v248 = vmul.f32 1.0, %v247
        %v249 = vmul.f32 %v244, 1.0614054
        %v250 = vmul.f32 %v246, 1.0614054
        %v251 = vmul.f32 %v248, 1.0614054
        %v252 = vadd.f32 %v249, -1.4531521
        %v253 = vadd.f32 %v250, -1.4531521
        %v254 = vadd.f32 %v251, -1.4531521
        %v255 = vmul.f32 %v244, %v252
        %v256 = vmul.f32 %v246, %v253
        %v257 = vmul.f32 %v248, %v254
        %v258 = vadd.f32 %v255, 1.4214138
        %v259 = vadd.f32 %v256, 1.4214138
        %v260 = vadd.f32 %v257, 1.4214138
        %v261 = vmul.f32 %v244, %v258
        %v262 = vmul.f32 %v246, %v259
        %v263 = vmul.f32 %v248, %v260
        %v264 = vadd.f32 %v261, -0.28449672
        %v265 = vadd.f32 %v262, -0.28449672
        %v266 = vadd.f32 %v263, -0.28449672
        %v267 = vmul.f32 %v244, %v264
        %v268 = vmul.f32 %v246, %v265
        %v269 = vmul.f32 %v248, %v266
        %v270 = vadd.f32 %v267, 0.2548296
        %v271 = vadd.f32 %v268, 0.2548296
        %v272 = vadd.f32 %v269, 0.2548296
        %v273 = vmul.f32 %v244, %v270
        %v274 = vmul.f32 %v246, %v271
        %v275 = vmul.f32 %v248, %v272
        %v276 = vsub.f32 0.0, %v234
        %v277 = vsub.f32 0.0, %v235
        %v278 = vsub.f32 0.0, %v236
        %v279 = vmul.f32 %v276, %v234
        %v280 = vmul.f32 %v277, %v235
        %v281 = vmul.f32 %v278, %v236
        %v282 = vmul.f32 %v279, 1.442695
        %v283 = vpow.pop %v282
        %v284 = vmul.f32 %v280, 1.442695
        %v285 = vpow.pop %v284
        %v286 = vmul.f32 %v281, 1.442695
        %v287 = vpow.pop %v286
        %v288 = vmul.f32 %v273, %v283
        %v289 = vmul.f32 %v274, %v285
        %v290 = vmul.f32 %v275, %v287
        %v291 = vsub.f32 1.0, %v288
        %v292 = vsub.f32 1.0, %v289
        %v293 = vsub.f32 1.0, %v290
        %vm294 = vcmp.lt.f32.partialorder %v231, 0.0
        %vm295 = vcmp.lt.f32.partialorder %v232, 0.0
        %vm296 = vcmp.lt.f32.partialorder %v233, 0.0
        %v297 = vsub.f32 0.0, %v291
        %v298 = vsub.f32 0.0, %v292
        %v299 = vsub.f32 0.0, %v293
        %v300 = vsel %vm294, %v297, %v291
        %v301 = vsel %vm295, %v298, %v292
        %v302 = vsel %vm296, %v299, %v293
        %v303 = vmul.f32 %v228, 0.5
        %v304 = vmul.f32 %v229, 0.5
        %v305 = vmul.f32 %v230, 0.5
        %v306 = vadd.f32 %v300, 1.0
        %v307 = vadd.f32 %v301, 1.0
        %v308 = vadd.f32 %v302, 1.0
        %v309 = vmul.f32 %v303, %v306
        %v310 = vmul.f32 %v304, %v307
        %v311 = vmul.f32 %v305, %v308
        %vm315 = vcmask 1044480
        %v316 = vrot.slane %v309, 3
        %v317 = vrot.slane %v310, 3
        %v318 = vsel %vm315, %v316, %v317
        %v319 = vrot.slane %v311, 3
        %v320 = vsel %vm315, %v317, %v319
        %v323 = vadd.f32 %v201, %v318
        %v324 = vadd.f32 %v202, %v320
        %v325 = vlaneseq
        %v326 = vshrl.u32 %v325, 7
        %v327 = vsub.s32 1, %v326
        %v328 = vrot.slane %v203, %v327
        %v329 = vmul.f32 %v215, %v328
        %v330 = vmul.f32 %v211, %v328
        %v331 = vmul.f32 %v216, %v328
        %v332 = vlaneseq
        %v333 = vshrl.u32 %v332, 7
        %v334 = vsub.s32 2, %v333
        %v335 = vrot.slane %v203, %v334
        %v336 = vmul.f32 %v215, %v335
        %v337 = vmul.f32 %v211, %v335
        %v338 = vmul.f32 %v216, %v335
        %vm342 = vcmask 1046528
        %v343 = vrot.slane %v336, 1
        %v344 = vrot.slane %v337, 1
        %v345 = vsel %vm342, %v343, %v344
        %v346 = vrot.slane %v338, 1
        %v347 = vsel %vm342, %v344, %v346
        %v351 = vadd.f32 %v329, %v345
        %v352 = vadd.f32 %v330, %v347
        %v353 = vadd.f32 %v331, %v346
        %v354 = vlaneseq
        %v355 = vshrl.u32 %v354, 7
        %v356 = vsub.s32 3, %v355
        %v357 = vrot.slane %v203, %v356
        %v358 = vmul.f32 %v215, %v357
        %v359 = vmul.f32 %v211, %v357
        %v360 = vmul.f32 %v216, %v357
        %vm364 = vcmask 1045504
        %v365 = vrot.slane %v358, 2
        %v366 = vrot.slane %v359, 2
        %v367 = vsel %vm364, %v365, %v366
        %v368 = vrot.slane %v360, 2
        %v369 = vsel %vm364, %v366, %v368
        %v373 = vadd.f32 %v351, %v367
        %v374 = vadd.f32 %v352, %v369
        %v375 = vadd.f32 %v353, %v368
        %v376 = vlaneseq
        %v377 = vshrl.u32 %v376, 7
        %v378 = vsub.s32 1, %v377
        %v379 = vrot.slane %v205, %v378
        %v380 = vadd.f32 %v373, %v379
        %v381 = vadd.f32 %v374, %v379
        %v382 = vadd.f32 %v375, %v379
        %v383 = vmul.f32 %v380, 0.70710677
        %v384 = vmul.f32 %v381, 0.70710677
        %v385 = vmul.f32 %v382, 0.70710677
        %v386 = vand.u32 2147483647, %v383
        %v387 = vand.u32 2147483647, %v384
        %v388 = vand.u32 2147483647, %v385
        %v389 = vmul.f32 %v386, 0.3275911
        %v390 = vmul.f32 %v387, 0.3275911
        %v391 = vmul.f32 %v388, 0.3275911
        %v392 = vadd.f32 %v389, 1.0
        %v393 = vadd.f32 %v390, 1.0
        %v394 = vadd.f32 %v391, 1.0
        %v395 = vrcp.pop %v392
        %v396 = vmul.f32 1.0, %v395
        %v397 = vrcp.pop %v393
        %v398 = vmul.f32 1.0, %v397
        %v399 = vrcp.pop %v394
        %v400 = vmul.f32 1.0, %v399
        %v401 = vmul.f32 %v396, 1.0614054
        %v402 = vmul.f32 %v398, 1.0614054
        %v403 = vmul.f32 %v400, 1.0614054
        %v404 = vadd.f32 %v401, -1.4531521
        %v405 = vadd.f32 %v402, -1.4531521
        %v406 = vadd.f32 %v403, -1.4531521
        %v407 = vmul.f32 %v396, %v404
        %v408 = vmul.f32 %v398, %v405
        %v409 = vmul.f32 %v400, %v406
        %v410 = vadd.f32 %v407, 1.4214138
        %v411 = vadd.f32 %v408, 1.4214138
        %v412 = vadd.f32 %v409, 1.4214138
        %v413 = vmul.f32 %v396, %v410
        %v414 = vmul.f32 %v398, %v411
        %v415 = vmul.f32 %v400, %v412
        %v416 = vadd.f32 %v413, -0.28449672
        %v417 = vadd.f32 %v414, -0.28449672
        %v418 = vadd.f32 %v415, -0.28449672
        %v419 = vmul.f32 %v396, %v416
        %v420 = vmul.f32 %v398, %v417
        %v421 = vmul.f32 %v400, %v418
        %v422 = vadd.f32 %v419, 0.2548296
        %v423 = vadd.f32 %v420, 0.2548296
        %v424 = vadd.f32 %v421, 0.2548296
        %v425 = vmul.f32 %v396, %v422
        %v426 = vmul.f32 %v398, %v423
        %v427 = vmul.f32 %v400, %v424
        %v428 = vsub.f32 0.0, %v386
        %v429 = vsub.f32 0.0, %v387
        %v430 = vsub.f32 0.0, %v388
        %v431 = vmul.f32 %v428, %v386
        %v432 = vmul.f32 %v429, %v387
        %v433 = vmul.f32 %v430, %v388
        %v434 = vmul.f32 %v431, 1.442695
        %v435 = vpow.pop %v434
        %v436 = vmul.f32 %v432, 1.442695
        %v437 = vpow.pop %v436
        %v438 = vmul.f32 %v433, 1.442695
        %v439 = vpow.pop %v438
        %v440 = vmul.f32 %v425, %v435
        %v441 = vmul.f32 %v426, %v437
        %v442 = vmul.f32 %v427, %v439
        %v443 = vsub.f32 1.0, %v440
        %v444 = vsub.f32 1.0, %v441
        %v445 = vsub.f32 1.0, %v442
        %vm446 = vcmp.lt.f32.partialorder %v383, 0.0
        %vm447 = vcmp.lt.f32.partialorder %v384, 0.0
        %vm448 = vcmp.lt.f32.partialorder %v385, 0.0
        %v449 = vsub.f32 0.0, %v443
        %v450 = vsub.f32 0.0, %v444
        %v451 = vsub.f32 0.0, %v445
        %v452 = vsel %vm446, %v449, %v443
        %v453 = vsel %vm447, %v450, %v444
        %v454 = vsel %vm448, %v451, %v445
        %v455 = vmul.f32 %v380, 0.5
        %v456 = vmul.f32 %v381, 0.5
        %v457 = vmul.f32 %v382, 0.5
        %v458 = vadd.f32 %v452, 1.0
        %v459 = vadd.f32 %v453, 1.0
        %v460 = vadd.f32 %v454, 1.0
        %v461 = vmul.f32 %v455, %v458
        %v462 = vmul.f32 %v456, %v459
        %v463 = vmul.f32 %v457, %v460
        %v467 = vrot.slane %v461, 2
        %v468 = vrot.slane %v462, 2
        %v469 = vsel %vm364, %v467, %v468
        %v470 = vrot.slane %v463, 2
        %v471 = vsel %vm364, %v468, %v470
        %v474 = vadd.f32 %v323, %v469
        %v475 = vadd.f32 %v324, %v471
        %v476 = vlaneseq
        %v477 = vshrl.u32 %v476, 7
        %v478 = vsub.s32 4, %v477
        %v479 = vrot.slane %v203, %v478
        %v480 = vmul.f32 %v215, %v479
        %v481 = vmul.f32 %v211, %v479
        %v482 = vmul.f32 %v216, %v479
        %v483 = vlaneseq
        %v484 = vshrl.u32 %v483, 7
        %v485 = vsub.s32 5, %v484
        %v486 = vrot.slane %v203, %v485
        %v487 = vmul.f32 %v215, %v486
        %v488 = vmul.f32 %v211, %v486
        %v489 = vmul.f32 %v216, %v486
        %v493 = vrot.slane %v487, 1
        %v494 = vrot.slane %v488, 1
        %v495 = vsel %vm342, %v493, %v494
        %v496 = vrot.slane %v489, 1
        %v497 = vsel %vm342, %v494, %v496
        %v501 = vadd.f32 %v480, %v495
        %v502 = vadd.f32 %v481, %v497
        %v503 = vadd.f32 %v482, %v496
        %v504 = vlaneseq
        %v505 = vshrl.u32 %v504, 7
        %v506 = vsub.s32 6, %v505
        %v507 = vrot.slane %v203, %v506
        %v508 = vmul.f32 %v215, %v507
        %v509 = vmul.f32 %v211, %v507
        %v510 = vmul.f32 %v216, %v507
        %v514 = vrot.slane %v508, 2
        %v515 = vrot.slane %v509, 2
        %v516 = vsel %vm364, %v514, %v515
        %v517 = vrot.slane %v510, 2
        %v518 = vsel %vm364, %v515, %v517
        %v522 = vadd.f32 %v501, %v516
        %v523 = vadd.f32 %v502, %v518
        %v524 = vadd.f32 %v503, %v517
        %v525 = vlaneseq
        %v526 = vshrl.u32 %v525, 7
        %v527 = vsub.s32 7, %v526
        %v528 = vrot.slane %v203, %v527
        %v529 = vmul.f32 %v215, %v528
        %v530 = vmul.f32 %v211, %v528
        %v531 = vmul.f32 %v216, %v528
        %v535 = vrot.slane %v529, 3
        %v536 = vrot.slane %v530, 3
        %v537 = vsel %vm315, %v535, %v536
        %v538 = vrot.slane %v531, 3
        %v539 = vsel %vm315, %v536, %v538
        %v543 = vadd.f32 %v522, %v537
        %v544 = vadd.f32 %v523, %v539
        %v545 = vadd.f32 %v524, %v538
        %v546 = vlaneseq
        %v547 = vshrl.u32 %v546, 7
        %v548 = vsub.s32 0, %v547
        %v549 = vrot.slane %v204, %v548
        %v550 = vmul.f32 %v215, %v549
        %v551 = vmul.f32 %v211, %v549
        %v552 = vmul.f32 %v216, %v549
        %vm556 = vcmask 1043456
        %v557 = vrot.slane %v550, 4
        %v558 = vrot.slane %v551, 4
        %v559 = vsel %vm556, %v557, %v558
        %v560 = vrot.slane %v552, 4
        %v561 = vsel %vm556, %v558, %v560
        %v565 = vadd.f32 %v543, %v559
        %v566 = vadd.f32 %v544, %v561
        %v567 = vadd.f32 %v545, %v560
        %v568 = vlaneseq
        %v569 = vshrl.u32 %v568, 7
        %v570 = vsub.s32 2, %v569
        %v571 = vrot.slane %v205, %v570
        %v572 = vadd.f32 %v565, %v571
        %v573 = vadd.f32 %v566, %v571
        %v574 = vadd.f32 %v567, %v571
        %v575 = vmul.f32 %v572, 0.70710677
        %v576 = vmul.f32 %v573, 0.70710677
        %v577 = vmul.f32 %v574, 0.70710677
        %v578 = vand.u32 2147483647, %v575
        %v579 = vand.u32 2147483647, %v576
        %v580 = vand.u32 2147483647, %v577
        %v581 = vmul.f32 %v578, 0.3275911
        %v582 = vmul.f32 %v579, 0.3275911
        %v583 = vmul.f32 %v580, 0.3275911
        %v584 = vadd.f32 %v581, 1.0
        %v585 = vadd.f32 %v582, 1.0
        %v586 = vadd.f32 %v583, 1.0
        %v587 = vrcp.pop %v584
        %v588 = vmul.f32 1.0, %v587
        %v589 = vrcp.pop %v585
        %v590 = vmul.f32 1.0, %v589
        %v591 = vrcp.pop %v586
        %v592 = vmul.f32 1.0, %v591
        %v593 = vmul.f32 %v588, 1.0614054
        %v594 = vmul.f32 %v590, 1.0614054
        %v595 = vmul.f32 %v592, 1.0614054
        %v596 = vadd.f32 %v593, -1.4531521
        %v597 = vadd.f32 %v594, -1.4531521
        %v598 = vadd.f32 %v595, -1.4531521
        %v599 = vmul.f32 %v588, %v596
        %v600 = vmul.f32 %v590, %v597
        %v601 = vmul.f32 %v592, %v598
        %v602 = vadd.f32 %v599, 1.4214138
        %v603 = vadd.f32 %v600, 1.4214138
        %v604 = vadd.f32 %v601, 1.4214138
        %v605 = vmul.f32 %v588, %v602
        %v606 = vmul.f32 %v590, %v603
        %v607 = vmul.f32 %v592, %v604
        %v608 = vadd.f32 %v605, -0.28449672
        %v609 = vadd.f32 %v606, -0.28449672
        %v610 = vadd.f32 %v607, -0.28449672
        %v611 = vmul.f32 %v588, %v608
        %v612 = vmul.f32 %v590, %v609
        %v613 = vmul.f32 %v592, %v610
        %v614 = vadd.f32 %v611, 0.2548296
        %v615 = vadd.f32 %v612, 0.2548296
        %v616 = vadd.f32 %v613, 0.2548296
        %v617 = vmul.f32 %v588, %v614
        %v618 = vmul.f32 %v590, %v615
        %v619 = vmul.f32 %v592, %v616
        %v620 = vsub.f32 0.0, %v578
        %v621 = vsub.f32 0.0, %v579
        %v622 = vsub.f32 0.0, %v580
        %v623 = vmul.f32 %v620, %v578
        %v624 = vmul.f32 %v621, %v579
        %v625 = vmul.f32 %v622, %v580
        %v626 = vmul.f32 %v623, 1.442695
        %v627 = vpow.pop %v626
        %v628 = vmul.f32 %v624, 1.442695
        %v629 = vpow.pop %v628
        %v630 = vmul.f32 %v625, 1.442695
        %v631 = vpow.pop %v630
        %v632 = vmul.f32 %v617, %v627
        %v633 = vmul.f32 %v618, %v629
        %v634 = vmul.f32 %v619, %v631
        %v635 = vsub.f32 1.0, %v632
        %v636 = vsub.f32 1.0, %v633
        %v637 = vsub.f32 1.0, %v634
        %vm638 = vcmp.lt.f32.partialorder %v575, 0.0
        %vm639 = vcmp.lt.f32.partialorder %v576, 0.0
        %vm640 = vcmp.lt.f32.partialorder %v577, 0.0
        %v641 = vsub.f32 0.0, %v635
        %v642 = vsub.f32 0.0, %v636
        %v643 = vsub.f32 0.0, %v637
        %v644 = vsel %vm638, %v641, %v635
        %v645 = vsel %vm639, %v642, %v636
        %v646 = vsel %vm640, %v643, %v637
        %v647 = vmul.f32 %v572, 0.5
        %v648 = vmul.f32 %v573, 0.5
        %v649 = vmul.f32 %v574, 0.5
        %v650 = vadd.f32 %v644, 1.0
        %v651 = vadd.f32 %v645, 1.0
        %v652 = vadd.f32 %v646, 1.0
        %v653 = vmul.f32 %v647, %v650
        %v654 = vmul.f32 %v648, %v651
        %v655 = vmul.f32 %v649, %v652
        %v659 = vrot.slane %v653, 1
        %v660 = vrot.slane %v654, 1
        %v661 = vsel %vm342, %v659, %v660
        %v662 = vrot.slane %v655, 1
        %v663 = vsel %vm342, %v660, %v662
        %v666 = vadd.f32 %v474, %v661
        %v667 = vadd.f32 %v475, %v663
        %v668 = vlaneseq
        %v669 = vshrl.u32 %v668, 7
        %v670 = vsub.s32 1, %v669
        %v671 = vrot.slane %v204, %v670
        %v672 = vmul.f32 %v215, %v671
        %v673 = vmul.f32 %v211, %v671
        %v674 = vlaneseq
        %v675 = vshrl.u32 %v674, 7
        %v676 = vsub.s32 2, %v675
        %v677 = vrot.slane %v204, %v676
        %v678 = vmul.f32 %v215, %v677
        %v679 = vmul.f32 %v211, %v677
        %v680 = vmul.f32 %v216, %v677
        %v684 = vrot.slane %v678, 1
        %v685 = vrot.slane %v679, 1
        %v686 = vsel %vm342, %v684, %v685
        %v687 = vrot.slane %v680, 1
        %v688 = vsel %vm342, %v685, %v687
        %v691 = vadd.f32 %v672, %v686
        %v692 = vadd.f32 %v673, %v688
        %v693 = vlaneseq
        %v694 = vshrl.u32 %v693, 7
        %v695 = vsub.s32 3, %v694
        %v696 = vrot.slane %v204, %v695
        %v697 = vmul.f32 %v215, %v696
        %v698 = vmul.f32 %v211, %v696
        %v699 = vmul.f32 %v216, %v696
        %v703 = vrot.slane %v697, 2
        %v704 = vrot.slane %v698, 2
        %v705 = vsel %vm364, %v703, %v704
        %v706 = vrot.slane %v699, 2
        %v707 = vsel %vm364, %v704, %v706
        %v710 = vadd.f32 %v691, %v705
        %v711 = vadd.f32 %v692, %v707
        %v712 = vlaneseq
        %v713 = vshrl.u32 %v712, 7
        %v714 = vsub.s32 4, %v713
        %v715 = vrot.slane %v204, %v714
        %v716 = vmul.f32 %v215, %v715
        %v717 = vmul.f32 %v211, %v715
        %v718 = vmul.f32 %v216, %v715
        %v722 = vrot.slane %v716, 3
        %v723 = vrot.slane %v717, 3
        %v724 = vsel %vm315, %v722, %v723
        %v725 = vrot.slane %v718, 3
        %v726 = vsel %vm315, %v723, %v725
        %v729 = vadd.f32 %v710, %v724
        %v730 = vadd.f32 %v711, %v726
        %v731 = vlaneseq
        %v732 = vshrl.u32 %v731, 7
        %v733 = vsub.s32 5, %v732
        %v734 = vrot.slane %v204, %v733
        %v735 = vmul.f32 %v215, %v734
        %v736 = vmul.f32 %v211, %v734
        %v737 = vmul.f32 %v216, %v734
        %v741 = vrot.slane %v735, 4
        %v742 = vrot.slane %v736, 4
        %v743 = vsel %vm556, %v741, %v742
        %v744 = vrot.slane %v737, 4
        %v745 = vsel %vm556, %v742, %v744
        %v748 = vadd.f32 %v729, %v743
        %v749 = vadd.f32 %v730, %v745
        %v750 = vlaneseq
        %v751 = vshrl.u32 %v750, 7
        %v752 = vsub.s32 6, %v751
        %v753 = vrot.slane %v204, %v752
        %v754 = vmul.f32 %v215, %v753
        %v755 = vmul.f32 %v211, %v753
        %v756 = vmul.f32 %v216, %v753
        %v760 = vrot.slane %v754, 5
        %v761 = vrot.slane %v755, 5
        %v762 = vsel %vm208, %v760, %v761
        %v763 = vrot.slane %v756, 5
        %v764 = vsel %vm208, %v761, %v763
        %v767 = vadd.f32 %v748, %v762
        %v768 = vadd.f32 %v749, %v764
        %v769 = vlaneseq
        %v770 = vshrl.u32 %v769, 7
        %v771 = vsub.s32 7, %v770
        %v772 = vrot.slane %v204, %v771
        %v773 = vmul.f32 %v215, %v772
        %v774 = vmul.f32 %v211, %v772
        %v775 = vmul.f32 %v216, %v772
        %vm779 = vcmask 1041408
        %v780 = vrot.slane %v773, 6
        %v781 = vrot.slane %v774, 6
        %v782 = vsel %vm779, %v780, %v781
        %v783 = vrot.slane %v775, 6
        %v784 = vsel %vm779, %v781, %v783
        %v787 = vadd.f32 %v767, %v782
        %v788 = vadd.f32 %v768, %v784
        %v789 = vlaneseq
        %v790 = vshrl.u32 %v789, 7
        %v791 = vsub.s32 3, %v790
        %v792 = vrot.slane %v205, %v791
        %v793 = vadd.f32 %v787, %v792
        %v794 = vadd.f32 %v788, %v792
        %v795 = vmul.f32 %v793, 0.70710677
        %v796 = vmul.f32 %v794, 0.70710677
        %v797 = vand.u32 2147483647, %v795
        %v798 = vand.u32 2147483647, %v796
        %v799 = vmul.f32 %v797, 0.3275911
        %v800 = vmul.f32 %v798, 0.3275911
        %v801 = vadd.f32 %v799, 1.0
        %v802 = vadd.f32 %v800, 1.0
        %v803 = vrcp.pop %v801
        %v804 = vmul.f32 1.0, %v803
        %v805 = vrcp.pop %v802
        %v806 = vmul.f32 1.0, %v805
        %v807 = vmul.f32 %v804, 1.0614054
        %v808 = vmul.f32 %v806, 1.0614054
        %v809 = vadd.f32 %v807, -1.4531521
        %v810 = vadd.f32 %v808, -1.4531521
        %v811 = vmul.f32 %v804, %v809
        %v812 = vmul.f32 %v806, %v810
        %v813 = vadd.f32 %v811, 1.4214138
        %v814 = vadd.f32 %v812, 1.4214138
        %v815 = vmul.f32 %v804, %v813
        %v816 = vmul.f32 %v806, %v814
        %v817 = vadd.f32 %v815, -0.28449672
        %v818 = vadd.f32 %v816, -0.28449672
        %v819 = vmul.f32 %v804, %v817
        %v820 = vmul.f32 %v806, %v818
        %v821 = vadd.f32 %v819, 0.2548296
        %v822 = vadd.f32 %v820, 0.2548296
        %v823 = vmul.f32 %v804, %v821
        %v824 = vmul.f32 %v806, %v822
        %v825 = vsub.f32 0.0, %v797
        %v826 = vsub.f32 0.0, %v798
        %v827 = vmul.f32 %v825, %v797
        %v828 = vmul.f32 %v826, %v798
        %v829 = vmul.f32 %v827, 1.442695
        %v830 = vpow.pop %v829
        %v831 = vmul.f32 %v828, 1.442695
        %v832 = vpow.pop %v831
        %v833 = vmul.f32 %v823, %v830
        %v834 = vmul.f32 %v824, %v832
        %v835 = vsub.f32 1.0, %v833
        %v836 = vsub.f32 1.0, %v834
        %vm837 = vcmp.lt.f32.partialorder %v795, 0.0
        %vm838 = vcmp.lt.f32.partialorder %v796, 0.0
        %v839 = vsub.f32 0.0, %v835
        %v840 = vsub.f32 0.0, %v836
        %v841 = vsel %vm837, %v839, %v835
        %v842 = vsel %vm838, %v840, %v836
        %v843 = vmul.f32 %v793, 0.5
        %v844 = vmul.f32 %v794, 0.5
        %v845 = vadd.f32 %v841, 1.0
        %v846 = vadd.f32 %v842, 1.0
        %v847 = vmul.f32 %v843, %v845
        %v848 = vmul.f32 %v844, %v846
        %v849 = vadd.f32 %v666, %v847
        %v850 = vadd.f32 %v667, %v848
        %vm851 = vcmask 982016
        %852 = vst.msk [vmem:[%s200] sm:$0xff] %vm851, %v849
        %853 = vst.msk [vmem:[%s200 + $0x8] sm:$0xff] %vm851, %v850
        %s854 = sand.u32 %s96, 1
        %s855 = scalar_lea.sflag [#allocation4], %s854
        %s856 = sand.u32 %s96, 1
        %s857 = smul.addr %s856, 16
        %s858 = scalar_lea.vmem [#allocation7], %s857
        // Predicated region
        $region37: #{tpu_custom_call.1} parent=27 // pred_check
          %p859 = pneg %p106
        $region38: #{tpu_custom_call.1} parent=27 // pred_check_branch
          %861 = sbr.rel (%p859) target = $region40
        $region39: #{tpu_custom_call.1} parent=27 // pred_region
          %s863 = ssub.s32 256, 256
          %864 = vsyncadd %s855, %s863
          %s865 = smul.addr %s25, 2
          %s866 = sadd.s32 %s24, %s865
          %s867 = smul.addr %s866, 128
          %s868 = scalar_lea.hbm %s2, %s867
          %s869 = sshll.u32 %s858, 4
          %s870 = int_to_ptr.vmem [resolvable:$true] %s869
          %875 = dma.vmem_to_hbm [thread:$0]  %s870, 256, %s868, %s855, 128, 128, 8
        $region40: #{tpu_custom_call.1} parent=27 // pred_fallthru
          _
      $region28: #{tpu_custom_call.1} parent=5 // pred_fallthru
        _
      %p876 = scmp.le.s32.totalorder 2, %s15
      // Predicated region
      $region41: #{tpu_custom_call.1} parent=5 // pred_check
        %p877 = pneg %p876
      $region42: #{tpu_custom_call.1} parent=5 // pred_check_branch
        %879 = sbr.rel (%p877) target = $region44
      $region43: #{tpu_custom_call.1} parent=5 // pred_region
        %s880 = ssub.s32 %s15, 2
        // Predicated region
        $region45: #{tpu_custom_call.1} parent=43 // pred_check
          %p881 = pneg %p112
        $region46: #{tpu_custom_call.1} parent=43 // pred_check_branch
          %883 = sbr.rel (%p881) target = $region48
        $region47: #{tpu_custom_call.1} parent=43 // pred_region
          %s884 = sand.u32 %s97, 1
          %s885 = scalar_lea.sflag [#allocation4], %s884
          %s886 = sand.u32 %s97, 1
          %s887 = smul.addr %s886, 16
          %s888 = scalar_lea.vmem [#allocation7], %s887
          %889 = dma.done %s885, 256
        $region48: #{tpu_custom_call.1} parent=43 // pred_fallthru
          _
      $region44: #{tpu_custom_call.1} parent=5 // pred_fallthru
        _
    $region6: #{tpu_custom_call.1} parent=1 // loop_footer
      %s19 = sadd.s32 1, %s15
    $region7: #{tpu_custom_call.1} parent=1 // loop_footer_branch
      %14 = sbr.rel target = $region3
    $region8: #{tpu_custom_call.1} parent=1 // loop_exit
      _
    %890 = vsyncpa [#allocation3], 1
    %s891 = scalar_lea.sflag [#allocation3], 1
    %892 = vsyncpa %s891, 1
    %893 = vsyncpa [#allocation6], 1
    %894 = vsyncpa [#allocation4], 1
    %s895 = scalar_lea.sflag [#allocation4], 1
    %896 = vsyncpa %s895, 1

</llo_original>
